<compile_context>
chip_gen: v7x
topology: tpu7x:2x2x1
jax: 0.10.0
libtpu: 0.0.40
codegen_flags: <defaults>
</compile_context>

<pallas_src>
import jax
import jax.numpy as jnp
from jax.experimental import pallas as pl
from jax.experimental.pallas import tpu as pltpu

BN_EPS = 1e-5


# --------------------------------------------------------------------------- kernel
def _cbow_fused_kernel(ctx_ref,          # SMEM (B*C,) int32 context ids (scalar prefetch)
                       emb_ref,          # VMEM (V, E) f32 embedding table (resident)
                       w1_ref, b1_ref,   # VMEM (E, H) bf16 / (1, H) f32   (BN1 folded in)
                       w2_ref, b2_ref,   # VMEM (H, E) bf16 / (1, E) f32   (BN2 folded in)
                       wo_ref, bo_ref,   # VMEM (E, tn) bf16 / (1, tn) f32 (BN3 folded in)
                       out_ref,          # out  (B, tn) f32 logits tile
                       xbuf):            # VMEM scratch (B, E) f32
    B, _ = xbuf.shape
    C = ctx_ref.shape[0] // B
    inv_c = 1.0 / C

    # Embedding gather + context mean in f32.  Recomputed on every vocab tile: it is
    # ~1 MFLOP, and unconditional recompute stays correct when the vocab grid axis is
    # sharded across TensorCores ("parallel") on v7x.
    for b in range(B):
        row = emb_ref[pl.ds(ctx_ref[b * C], 1), :]
        for c in range(1, C):
            row = row + emb_ref[pl.ds(ctx_ref[b * C + c], 1), :]
        xbuf[pl.ds(b, 1), :] = row * inv_c
    x = xbuf[...]                                     # (B, E) f32

    # hidden1 (BN1 folded into w1/b1) + ReLU
    x = jnp.dot(x.astype(jnp.bfloat16), w1_ref[...],
                preferred_element_type=jnp.float32) + b1_ref[...]
    x = jnp.maximum(x, 0.0)

    # hidden2 (BN2 folded into w2/b2) + ReLU   (dropout = identity in eval mode)
    x = jnp.dot(x.astype(jnp.bfloat16), w2_ref[...],
                preferred_element_type=jnp.float32) + b2_ref[...]
    x = jnp.maximum(x, 0.0)

    # One lane-dense vocab tile of the output projection (BN3 folded into wo/bo).
    out_ref[...] = (
        jnp.dot(x.astype(jnp.bfloat16), wo_ref[...],
                preferred_element_type=jnp.float32)
        + bo_ref[...]
    )


# --------------------------------------------------------------------------- wrapper
def _pick_vocab_tile(V):
    """Widest lane-dense tile (multiple of 128, <= 2048) that divides V."""
    if V % 128 != 0:
        return V
    for tn in (2048, 1024, 512, 256, 128):
        if tn <= V and V % tn == 0:
            return tn
    return V


def cbow_forward(context, fp):
    """context: int32 (B, C) token ids.  fp: folded params.  Returns f32 (B, V) logits."""
    if context.ndim == 1:
        context = context[None, :]
    context = context.astype(jnp.int32)
    B, C = context.shape
    V, E = fp["emb"].shape
    H = fp["w1"].shape[1]

    tn = _pick_vocab_tile(V)
    nv = V // tn
    ctx_flat = context.reshape(B * C)                 # 1-D scalar-prefetch (SMEM friendly)

    logits = pl.pallas_call(
        _cbow_fused_kernel,
        out_shape=jax.ShapeDtypeStruct((B, V), jnp.float32),
        grid_spec=pltpu.PrefetchScalarGridSpec(
            num_scalar_prefetch=1,
            grid=(nv,),
            in_specs=[
                pl.BlockSpec((V, E), lambda j, ctx: (0, 0)),    # emb resident in VMEM
                pl.BlockSpec((E, H), lambda j, ctx: (0, 0)),
                pl.BlockSpec((1, H), lambda j, ctx: (0, 0)),
                pl.BlockSpec((H, E), lambda j, ctx: (0, 0)),
                pl.BlockSpec((1, E), lambda j, ctx: (0, 0)),
                pl.BlockSpec((E, tn), lambda j, ctx: (0, j)),   # wo vocab tile
                pl.BlockSpec((1, tn), lambda j, ctx: (0, j)),   # bo vocab tile
            ],
            out_specs=pl.BlockSpec((B, tn), lambda j, ctx: (0, j)),
            scratch_shapes=[pltpu.VMEM((B, E), jnp.float32)],
        ),
        compiler_params=pltpu.CompilerParams(
            dimension_semantics=("parallel",),
            vmem_limit_bytes=32 << 20,
        ),
    )(ctx_flat, fp["emb"], fp["w1"], fp["b1"], fp["w2"], fp["b2"], fp["wo"], fp["bo"])
    return logits


# --------------------------------------------------------------------------- params
def _xavier_uniform(key, shape):
    fan_out, fan_in = shape
    bound = (6.0 / (fan_in + fan_out)) ** 0.5
    return jax.random.uniform(key, shape, jnp.float32, -bound, bound)


def init_params(key, vocab_size, embed_size):
    V, E, H = vocab_size, embed_size, 2 * embed_size
    ks = jax.random.split(key, 7)

    emb = _xavier_uniform(ks[0], (V, E))          # nn.Embedding weight
    w1 = _xavier_uniform(ks[1], (H, E))           # hidden1 weight (out, in)
    w2 = _xavier_uniform(ks[2], (E, H))           # hidden2 weight
    wo = _xavier_uniform(ks[3], (V, E))           # output weight

    def linear_bias(k, fan_in, n):
        b = 1.0 / (fan_in ** 0.5)
        return jax.random.uniform(k, (1, n), jnp.float32, -b, b)

    def bn(n):
        return dict(gamma=jnp.ones((n,), jnp.float32), beta=jnp.zeros((n,), jnp.float32),
                    mean=jnp.zeros((n,), jnp.float32), var=jnp.ones((n,), jnp.float32))

    return {
        "emb": emb,
        "w1": w1.T, "b1": linear_bias(ks[4], E, H),   # stored (in, out)
        "w2": w2.T, "b2": linear_bias(ks[5], H, E),
        "wo": wo.T, "bo": linear_bias(ks[6], E, V),
        "bn1": bn(E), "bn2": bn(H), "bn3": bn(E),
    }


def fold_params(p):
    """Fold eval-mode BatchNorm into the following Linear; cast matmul weights to bf16."""
    def scale_shift(bn):
        s = bn["gamma"] / jnp.sqrt(bn["var"] + BN_EPS)
        t = bn["beta"] - bn["mean"] * s
        return s, t

    s1, t1 = scale_shift(p["bn1"])
    s2, t2 = scale_shift(p["bn2"])
    s3, t3 = scale_shift(p["bn3"])

    w1 = p["w1"] * s1[:, None]
    b1 = t1[None, :] @ p["w1"] + p["b1"]
    w2 = p["w2"] * s2[:, None]
    b2 = t2[None, :] @ p["w2"] + p["b2"]
    wo = p["wo"] * s3[:, None]
    bo = t3[None, :] @ p["wo"] + p["bo"]

    return {
        "emb": p["emb"].astype(jnp.float32),          # VMEM-resident, gathered in f32
        "w1": w1.astype(jnp.bfloat16), "b1": b1.astype(jnp.float32),
        "w2": w2.astype(jnp.bfloat16), "b2": b2.astype(jnp.float32),
        "wo": wo.astype(jnp.bfloat16), "bo": bo.astype(jnp.float32),
    }


def reference_forward(context, p):
    """Pure-JAX f32 reference with the same eval-mode semantics."""
    if context.ndim == 1:
        context = context[None, :]

    def bn(x, b):
        return (x - b["mean"]) / jnp.sqrt(b["var"] + BN_EPS) * b["gamma"] + b["beta"]

    x = jnp.mean(p["emb"][context], axis=1)
    x = bn(x, p["bn1"])
    x = jnp.maximum(x @ p["w1"] + p["b1"], 0.0)
    x = bn(x, p["bn2"])                           # dropout = identity (eval)
    x = jnp.maximum(x @ p["w2"] + p["b2"], 0.0)
    x = bn(x, p["bn3"])
    return x @ p["wo"] + p["bo"]


# --------------------------------------------------------------------------- driver
if __name__ == "__main__":
    VOCAB_SIZE = 512     # multiple of 128 -> single 512-wide lane-dense vocab tile
    EMBED_SIZE = 128     # lane-dense feature dims (hidden = 256)
    BATCH = 8
    CONTEXT = 4

    key = jax.random.PRNGKey(0)
    k_params, k_ctx = jax.random.split(key)

    params = init_params(k_params, VOCAB_SIZE, EMBED_SIZE)
    fparams = fold_params(params)
    context = jax.random.randint(k_ctx, (BATCH, CONTEXT), 0, VOCAB_SIZE, dtype=jnp.int32)

    fwd = jax.jit(cbow_forward)
    logits = jax.block_until_ready(fwd(context, fparams))

    ref = reference_forward(context, params)
    assert logits.shape == (BATCH, VOCAB_SIZE)
    max_err = float(jnp.max(jnp.abs(logits - ref)))
    assert jnp.allclose(logits, ref, atol=1e-2, rtol=1e-2), max_err

    print("KERNEL_OK")
</pallas_src>

<mosaic_0001>
module attributes {stable_mosaic.version = 11 : i64} {
  func.func @_cbow_fused_kernel(%arg0: i32, %arg1: memref<32xi32, #tpu.memory_space<smem>>, %arg2: memref<512x128xf32, #tpu.memory_space<vmem>>, %arg3: memref<128x256xbf16, #tpu.memory_space<vmem>>, %arg4: memref<1x256xf32, #tpu.memory_space<vmem>>, %arg5: memref<256x128xbf16, #tpu.memory_space<vmem>>, %arg6: memref<1x128xf32, #tpu.memory_space<vmem>>, %arg7: memref<128x512xbf16, #tpu.memory_space<vmem>>, %arg8: memref<1x512xf32, #tpu.memory_space<vmem>>, %arg9: memref<8x512xf32, #tpu.memory_space<vmem>>, %arg10: memref<8x128xf32, #tpu.memory_space<vmem>>) attributes {dimension_semantics = [#tpu.dimension_semantics<parallel>], iteration_bounds = array<i64: 1>, scalar_prefetch = 1 : i64, scratch_operands = 1 : i64, tpu.core_type = #tpu.core_type<tc>, window_params = [{pipeline_mode = #tpu.pipeline_mode<synchronous>, transform_indices = @transform_0, window_bounds = array<i64: 512, 128>}, {pipeline_mode = #tpu.pipeline_mode<synchronous>, transform_indices = @transform_1, window_bounds = array<i64: 128, 256>}, {pipeline_mode = #tpu.pipeline_mode<synchronous>, transform_indices = @transform_2, window_bounds = array<i64: 1, 256>}, {pipeline_mode = #tpu.pipeline_mode<synchronous>, transform_indices = @transform_3, window_bounds = array<i64: 256, 128>}, {pipeline_mode = #tpu.pipeline_mode<synchronous>, transform_indices = @transform_4, window_bounds = array<i64: 1, 128>}, {transform_indices = @transform_5, window_bounds = array<i64: 128, 512>}, {transform_indices = @transform_6, window_bounds = array<i64: 1, 512>}, {transform_indices = @transform_7, window_bounds = array<i64: 8, 512>}]} {
    %c0 = arith.constant 0 : index
    %0 = memref.load %arg1[%c0] : memref<32xi32, #tpu.memory_space<smem>>
    %1 = arith.index_cast %0 : i32 to index
    %c0_0 = arith.constant 0 : index
    %2 = vector.load %arg2[%1, %c0_0] : memref<512x128xf32, #tpu.memory_space<vmem>>, vector<1x128xf32>
    %c1 = arith.constant 1 : index
    %3 = memref.load %arg1[%c1] : memref<32xi32, #tpu.memory_space<smem>>
    %4 = arith.index_cast %3 : i32 to index
    %c0_1 = arith.constant 0 : index
    %5 = vector.load %arg2[%4, %c0_1] : memref<512x128xf32, #tpu.memory_space<vmem>>, vector<1x128xf32>
    %6 = arith.addf %2, %5 : vector<1x128xf32>
    %c2 = arith.constant 2 : index
    %7 = memref.load %arg1[%c2] : memref<32xi32, #tpu.memory_space<smem>>
    %8 = arith.index_cast %7 : i32 to index
    %c0_2 = arith.constant 0 : index
    %9 = vector.load %arg2[%8, %c0_2] : memref<512x128xf32, #tpu.memory_space<vmem>>, vector<1x128xf32>
    %10 = arith.addf %6, %9 : vector<1x128xf32>
    %c3 = arith.constant 3 : index
    %11 = memref.load %arg1[%c3] : memref<32xi32, #tpu.memory_space<smem>>
    %12 = arith.index_cast %11 : i32 to index
    %c0_3 = arith.constant 0 : index
    %13 = vector.load %arg2[%12, %c0_3] : memref<512x128xf32, #tpu.memory_space<vmem>>, vector<1x128xf32>
    %14 = arith.addf %10, %13 : vector<1x128xf32>
    %cst = arith.constant 2.500000e-01 : f32
    %15 = vector.broadcast %cst : f32 to vector<1x128xf32>
    %16 = arith.mulf %14, %15 : vector<1x128xf32>
    %c0_4 = arith.constant 0 : index
    %c0_5 = arith.constant 0 : index
    %17 = vector.load %arg10[%c0_4, %c0_5] : memref<8x128xf32, #tpu.memory_space<vmem>>, vector<1x128xf32>
    tpu.vector_store %arg10[%c0_4, %c0_5], %16 {strides = array<i32>} : memref<8x128xf32, #tpu.memory_space<vmem>>, vector<1x128xf32>,
    %c4 = arith.constant 4 : index
    %18 = memref.load %arg1[%c4] : memref<32xi32, #tpu.memory_space<smem>>
    %19 = arith.index_cast %18 : i32 to index
    %c0_6 = arith.constant 0 : index
    %20 = vector.load %arg2[%19, %c0_6] : memref<512x128xf32, #tpu.memory_space<vmem>>, vector<1x128xf32>
    %c5 = arith.constant 5 : index
    %21 = memref.load %arg1[%c5] : memref<32xi32, #tpu.memory_space<smem>>
    %22 = arith.index_cast %21 : i32 to index
    %c0_7 = arith.constant 0 : index
    %23 = vector.load %arg2[%22, %c0_7] : memref<512x128xf32, #tpu.memory_space<vmem>>, vector<1x128xf32>
    %24 = arith.addf %20, %23 : vector<1x128xf32>
    %c6 = arith.constant 6 : index
    %25 = memref.load %arg1[%c6] : memref<32xi32, #tpu.memory_space<smem>>
    %26 = arith.index_cast %25 : i32 to index
    %c0_8 = arith.constant 0 : index
    %27 = vector.load %arg2[%26, %c0_8] : memref<512x128xf32, #tpu.memory_space<vmem>>, vector<1x128xf32>
    %28 = arith.addf %24, %27 : vector<1x128xf32>
    %c7 = arith.constant 7 : index
    %29 = memref.load %arg1[%c7] : memref<32xi32, #tpu.memory_space<smem>>
    %30 = arith.index_cast %29 : i32 to index
    %c0_9 = arith.constant 0 : index
    %31 = vector.load %arg2[%30, %c0_9] : memref<512x128xf32, #tpu.memory_space<vmem>>, vector<1x128xf32>
    %32 = arith.addf %28, %31 : vector<1x128xf32>
    %cst_10 = arith.constant 2.500000e-01 : f32
    %33 = vector.broadcast %cst_10 : f32 to vector<1x128xf32>
    %34 = arith.mulf %32, %33 : vector<1x128xf32>
    %c1_11 = arith.constant 1 : index
    %c0_12 = arith.constant 0 : index
    %35 = vector.load %arg10[%c1_11, %c0_12] : memref<8x128xf32, #tpu.memory_space<vmem>>, vector<1x128xf32>
    tpu.vector_store %arg10[%c1_11, %c0_12], %34 {strides = array<i32>} : memref<8x128xf32, #tpu.memory_space<vmem>>, vector<1x128xf32>,
    %c8 = arith.constant 8 : index
    %36 = memref.load %arg1[%c8] : memref<32xi32, #tpu.memory_space<smem>>
    %37 = arith.index_cast %36 : i32 to index
    %c0_13 = arith.constant 0 : index
    %38 = vector.load %arg2[%37, %c0_13] : memref<512x128xf32, #tpu.memory_space<vmem>>, vector<1x128xf32>
    %c9 = arith.constant 9 : index
    %39 = memref.load %arg1[%c9] : memref<32xi32, #tpu.memory_space<smem>>
    %40 = arith.index_cast %39 : i32 to index
    %c0_14 = arith.constant 0 : index
    %41 = vector.load %arg2[%40, %c0_14] : memref<512x128xf32, #tpu.memory_space<vmem>>, vector<1x128xf32>
    %42 = arith.addf %38, %41 : vector<1x128xf32>
    %c10 = arith.constant 10 : index
    %43 = memref.load %arg1[%c10] : memref<32xi32, #tpu.memory_space<smem>>
    %44 = arith.index_cast %43 : i32 to index
    %c0_15 = arith.constant 0 : index
    %45 = vector.load %arg2[%44, %c0_15] : memref<512x128xf32, #tpu.memory_space<vmem>>, vector<1x128xf32>
    %46 = arith.addf %42, %45 : vector<1x128xf32>
    %c11 = arith.constant 11 : index
    %47 = memref.load %arg1[%c11] : memref<32xi32, #tpu.memory_space<smem>>
    %48 = arith.index_cast %47 : i32 to index
    %c0_16 = arith.constant 0 : index
    %49 = vector.load %arg2[%48, %c0_16] : memref<512x128xf32, #tpu.memory_space<vmem>>, vector<1x128xf32>
    %50 = arith.addf %46, %49 : vector<1x128xf32>
    %cst_17 = arith.constant 2.500000e-01 : f32
    %51 = vector.broadcast %cst_17 : f32 to vector<1x128xf32>
    %52 = arith.mulf %50, %51 : vector<1x128xf32>
    %c2_18 = arith.constant 2 : index
    %c0_19 = arith.constant 0 : index
    %53 = vector.load %arg10[%c2_18, %c0_19] : memref<8x128xf32, #tpu.memory_space<vmem>>, vector<1x128xf32>
    tpu.vector_store %arg10[%c2_18, %c0_19], %52 {strides = array<i32>} : memref<8x128xf32, #tpu.memory_space<vmem>>, vector<1x128xf32>,
    %c12 = arith.constant 12 : index
    %54 = memref.load %arg1[%c12] : memref<32xi32, #tpu.memory_space<smem>>
    %55 = arith.index_cast %54 : i32 to index
    %c0_20 = arith.constant 0 : index
    %56 = vector.load %arg2[%55, %c0_20] : memref<512x128xf32, #tpu.memory_space<vmem>>, vector<1x128xf32>
    %c13 = arith.constant 13 : index
    %57 = memref.load %arg1[%c13] : memref<32xi32, #tpu.memory_space<smem>>
    %58 = arith.index_cast %57 : i32 to index
    %c0_21 = arith.constant 0 : index
    %59 = vector.load %arg2[%58, %c0_21] : memref<512x128xf32, #tpu.memory_space<vmem>>, vector<1x128xf32>
    %60 = arith.addf %56, %59 : vector<1x128xf32>
    %c14 = arith.constant 14 : index
    %61 = memref.load %arg1[%c14] : memref<32xi32, #tpu.memory_space<smem>>
    %62 = arith.index_cast %61 : i32 to index
    %c0_22 = arith.constant 0 : index
    %63 = vector.load %arg2[%62, %c0_22] : memref<512x128xf32, #tpu.memory_space<vmem>>, vector<1x128xf32>
    %64 = arith.addf %60, %63 : vector<1x128xf32>
    %c15 = arith.constant 15 : index
    %65 = memref.load %arg1[%c15] : memref<32xi32, #tpu.memory_space<smem>>
    %66 = arith.index_cast %65 : i32 to index
    %c0_23 = arith.constant 0 : index
    %67 = vector.load %arg2[%66, %c0_23] : memref<512x128xf32, #tpu.memory_space<vmem>>, vector<1x128xf32>
    %68 = arith.addf %64, %67 : vector<1x128xf32>
    %cst_24 = arith.constant 2.500000e-01 : f32
    %69 = vector.broadcast %cst_24 : f32 to vector<1x128xf32>
    %70 = arith.mulf %68, %69 : vector<1x128xf32>
    %c3_25 = arith.constant 3 : index
    %c0_26 = arith.constant 0 : index
    %71 = vector.load %arg10[%c3_25, %c0_26] : memref<8x128xf32, #tpu.memory_space<vmem>>, vector<1x128xf32>
    tpu.vector_store %arg10[%c3_25, %c0_26], %70 {strides = array<i32>} : memref<8x128xf32, #tpu.memory_space<vmem>>, vector<1x128xf32>,
    %c16 = arith.constant 16 : index
    %72 = memref.load %arg1[%c16] : memref<32xi32, #tpu.memory_space<smem>>
    %73 = arith.index_cast %72 : i32 to index
    %c0_27 = arith.constant 0 : index
    %74 = vector.load %arg2[%73, %c0_27] : memref<512x128xf32, #tpu.memory_space<vmem>>, vector<1x128xf32>
    %c17 = arith.constant 17 : index
    %75 = memref.load %arg1[%c17] : memref<32xi32, #tpu.memory_space<smem>>
    %76 = arith.index_cast %75 : i32 to index
    %c0_28 = arith.constant 0 : index
    %77 = vector.load %arg2[%76, %c0_28] : memref<512x128xf32, #tpu.memory_space<vmem>>, vector<1x128xf32>
    %78 = arith.addf %74, %77 : vector<1x128xf32>
    %c18 = arith.constant 18 : index
    %79 = memref.load %arg1[%c18] : memref<32xi32, #tpu.memory_space<smem>>
    %80 = arith.index_cast %79 : i32 to index
    %c0_29 = arith.constant 0 : index
    %81 = vector.load %arg2[%80, %c0_29] : memref<512x128xf32, #tpu.memory_space<vmem>>, vector<1x128xf32>
    %82 = arith.addf %78, %81 : vector<1x128xf32>
    %c19 = arith.constant 19 : index
    %83 = memref.load %arg1[%c19] : memref<32xi32, #tpu.memory_space<smem>>
    %84 = arith.index_cast %83 : i32 to index
    %c0_30 = arith.constant 0 : index
    %85 = vector.load %arg2[%84, %c0_30] : memref<512x128xf32, #tpu.memory_space<vmem>>, vector<1x128xf32>
    %86 = arith.addf %82, %85 : vector<1x128xf32>
    %cst_31 = arith.constant 2.500000e-01 : f32
    %87 = vector.broadcast %cst_31 : f32 to vector<1x128xf32>
    %88 = arith.mulf %86, %87 : vector<1x128xf32>
    %c4_32 = arith.constant 4 : index
    %c0_33 = arith.constant 0 : index
    %89 = vector.load %arg10[%c4_32, %c0_33] : memref<8x128xf32, #tpu.memory_space<vmem>>, vector<1x128xf32>
    tpu.vector_store %arg10[%c4_32, %c0_33], %88 {strides = array<i32>} : memref<8x128xf32, #tpu.memory_space<vmem>>, vector<1x128xf32>,
    %c20 = arith.constant 20 : index
    %90 = memref.load %arg1[%c20] : memref<32xi32, #tpu.memory_space<smem>>
    %91 = arith.index_cast %90 : i32 to index
    %c0_34 = arith.constant 0 : index
    %92 = vector.load %arg2[%91, %c0_34] : memref<512x128xf32, #tpu.memory_space<vmem>>, vector<1x128xf32>
    %c21 = arith.constant 21 : index
    %93 = memref.load %arg1[%c21] : memref<32xi32, #tpu.memory_space<smem>>
    %94 = arith.index_cast %93 : i32 to index
    %c0_35 = arith.constant 0 : index
    %95 = vector.load %arg2[%94, %c0_35] : memref<512x128xf32, #tpu.memory_space<vmem>>, vector<1x128xf32>
    %96 = arith.addf %92, %95 : vector<1x128xf32>
    %c22 = arith.constant 22 : index
    %97 = memref.load %arg1[%c22] : memref<32xi32, #tpu.memory_space<smem>>
    %98 = arith.index_cast %97 : i32 to index
    %c0_36 = arith.constant 0 : index
    %99 = vector.load %arg2[%98, %c0_36] : memref<512x128xf32, #tpu.memory_space<vmem>>, vector<1x128xf32>
    %100 = arith.addf %96, %99 : vector<1x128xf32>
    %c23 = arith.constant 23 : index
    %101 = memref.load %arg1[%c23] : memref<32xi32, #tpu.memory_space<smem>>
    %102 = arith.index_cast %101 : i32 to index
    %c0_37 = arith.constant 0 : index
    %103 = vector.load %arg2[%102, %c0_37] : memref<512x128xf32, #tpu.memory_space<vmem>>, vector<1x128xf32>
    %104 = arith.addf %100, %103 : vector<1x128xf32>
    %cst_38 = arith.constant 2.500000e-01 : f32
    %105 = vector.broadcast %cst_38 : f32 to vector<1x128xf32>
    %106 = arith.mulf %104, %105 : vector<1x128xf32>
    %c5_39 = arith.constant 5 : index
    %c0_40 = arith.constant 0 : index
    %107 = vector.load %arg10[%c5_39, %c0_40] : memref<8x128xf32, #tpu.memory_space<vmem>>, vector<1x128xf32>
    tpu.vector_store %arg10[%c5_39, %c0_40], %106 {strides = array<i32>} : memref<8x128xf32, #tpu.memory_space<vmem>>, vector<1x128xf32>,
    %c24 = arith.constant 24 : index
    %108 = memref.load %arg1[%c24] : memref<32xi32, #tpu.memory_space<smem>>
    %109 = arith.index_cast %108 : i32 to index
    %c0_41 = arith.constant 0 : index
    %110 = vector.load %arg2[%109, %c0_41] : memref<512x128xf32, #tpu.memory_space<vmem>>, vector<1x128xf32>
    %c25 = arith.constant 25 : index
    %111 = memref.load %arg1[%c25] : memref<32xi32, #tpu.memory_space<smem>>
    %112 = arith.index_cast %111 : i32 to index
    %c0_42 = arith.constant 0 : index
    %113 = vector.load %arg2[%112, %c0_42] : memref<512x128xf32, #tpu.memory_space<vmem>>, vector<1x128xf32>
    %114 = arith.addf %110, %113 : vector<1x128xf32>
    %c26 = arith.constant 26 : index
    %115 = memref.load %arg1[%c26] : memref<32xi32, #tpu.memory_space<smem>>
    %116 = arith.index_cast %115 : i32 to index
    %c0_43 = arith.constant 0 : index
    %117 = vector.load %arg2[%116, %c0_43] : memref<512x128xf32, #tpu.memory_space<vmem>>, vector<1x128xf32>
    %118 = arith.addf %114, %117 : vector<1x128xf32>
    %c27 = arith.constant 27 : index
    %119 = memref.load %arg1[%c27] : memref<32xi32, #tpu.memory_space<smem>>
    %120 = arith.index_cast %119 : i32 to index
    %c0_44 = arith.constant 0 : index
    %121 = vector.load %arg2[%120, %c0_44] : memref<512x128xf32, #tpu.memory_space<vmem>>, vector<1x128xf32>
    %122 = arith.addf %118, %121 : vector<1x128xf32>
    %cst_45 = arith.constant 2.500000e-01 : f32
    %123 = vector.broadcast %cst_45 : f32 to vector<1x128xf32>
    %124 = arith.mulf %122, %123 : vector<1x128xf32>
    %c6_46 = arith.constant 6 : index
    %c0_47 = arith.constant 0 : index
    %125 = vector.load %arg10[%c6_46, %c0_47] : memref<8x128xf32, #tpu.memory_space<vmem>>, vector<1x128xf32>
    tpu.vector_store %arg10[%c6_46, %c0_47], %124 {strides = array<i32>} : memref<8x128xf32, #tpu.memory_space<vmem>>, vector<1x128xf32>,
    %c28 = arith.constant 28 : index
    %126 = memref.load %arg1[%c28] : memref<32xi32, #tpu.memory_space<smem>>
    %127 = arith.index_cast %126 : i32 to index
    %c0_48 = arith.constant 0 : index
    %128 = vector.load %arg2[%127, %c0_48] : memref<512x128xf32, #tpu.memory_space<vmem>>, vector<1x128xf32>
    %c29 = arith.constant 29 : index
    %129 = memref.load %arg1[%c29] : memref<32xi32, #tpu.memory_space<smem>>
    %130 = arith.index_cast %129 : i32 to index
    %c0_49 = arith.constant 0 : index
    %131 = vector.load %arg2[%130, %c0_49] : memref<512x128xf32, #tpu.memory_space<vmem>>, vector<1x128xf32>
    %132 = arith.addf %128, %131 : vector<1x128xf32>
    %c30 = arith.constant 30 : index
    %133 = memref.load %arg1[%c30] : memref<32xi32, #tpu.memory_space<smem>>
    %134 = arith.index_cast %133 : i32 to index
    %c0_50 = arith.constant 0 : index
    %135 = vector.load %arg2[%134, %c0_50] : memref<512x128xf32, #tpu.memory_space<vmem>>, vector<1x128xf32>
    %136 = arith.addf %132, %135 : vector<1x128xf32>
    %c31 = arith.constant 31 : index
    %137 = memref.load %arg1[%c31] : memref<32xi32, #tpu.memory_space<smem>>
    %138 = arith.index_cast %137 : i32 to index
    %c0_51 = arith.constant 0 : index
    %139 = vector.load %arg2[%138, %c0_51] : memref<512x128xf32, #tpu.memory_space<vmem>>, vector<1x128xf32>
    %140 = arith.addf %136, %139 : vector<1x128xf32>
    %cst_52 = arith.constant 2.500000e-01 : f32
    %141 = vector.broadcast %cst_52 : f32 to vector<1x128xf32>
    %142 = arith.mulf %140, %141 : vector<1x128xf32>
    %c7_53 = arith.constant 7 : index
    %c0_54 = arith.constant 0 : index
    %143 = vector.load %arg10[%c7_53, %c0_54] : memref<8x128xf32, #tpu.memory_space<vmem>>, vector<1x128xf32>
    tpu.vector_store %arg10[%c7_53, %c0_54], %142 {strides = array<i32>} : memref<8x128xf32, #tpu.memory_space<vmem>>, vector<1x128xf32>,
    %c0_55 = arith.constant 0 : index
    %c0_56 = arith.constant 0 : index
    %144 = vector.load %arg10[%c0_55, %c0_56] : memref<8x128xf32, #tpu.memory_space<vmem>>, vector<8x128xf32>
    %145 = arith.truncf %144 : vector<8x128xf32> to vector<8x128xbf16>
    %c0_57 = arith.constant 0 : index
    %c0_58 = arith.constant 0 : index
    %146 = vector.load %arg3[%c0_57, %c0_58] : memref<128x256xbf16, #tpu.memory_space<vmem>>, vector<128x256xbf16>
    %cst_59 = arith.constant dense<0.000000e+00> : vector<8x256xf32>
    %147 = tpu.matmul %145, %146, %cst_59 {dimension_numbers = #tpu.dot_dimension_numbers<[1], [0], [0], [1], [0, 0, 1, 1], [], []>} : vector<8x128xbf16>, vector<128x256xbf16>, vector<8x256xf32> -> vector<8x256xf32>
    %c0_60 = arith.constant 0 : index
    %c0_61 = arith.constant 0 : index
    %148 = vector.load %arg4[%c0_60, %c0_61] : memref<1x256xf32, #tpu.memory_space<vmem>>, vector<1x256xf32>
    %149 = vector.broadcast %148 : vector<1x256xf32> to vector<8x256xf32>
    %150 = arith.addf %147, %149 : vector<8x256xf32>
    %cst_62 = arith.constant 0.000000e+00 : f32
    %151 = vector.broadcast %cst_62 : f32 to vector<8x256xf32>
    %152 = arith.maximumf %150, %151 : vector<8x256xf32>
    %153 = arith.truncf %152 : vector<8x256xf32> to vector<8x256xbf16>
    %c0_63 = arith.constant 0 : index
    %c0_64 = arith.constant 0 : index
    %154 = vector.load %arg5[%c0_63, %c0_64] : memref<256x128xbf16, #tpu.memory_space<vmem>>, vector<256x128xbf16>
    %cst_65 = arith.constant dense<0.000000e+00> : vector<8x128xf32>
    %155 = tpu.matmul %153, %154, %cst_65 {dimension_numbers = #tpu.dot_dimension_numbers<[1], [0], [0], [1], [0, 0, 1, 1], [], []>} : vector<8x256xbf16>, vector<256x128xbf16>, vector<8x128xf32> -> vector<8x128xf32>
    %c0_66 = arith.constant 0 : index
    %c0_67 = arith.constant 0 : index
    %156 = vector.load %arg6[%c0_66, %c0_67] : memref<1x128xf32, #tpu.memory_space<vmem>>, vector<1x128xf32>
    %157 = vector.broadcast %156 : vector<1x128xf32> to vector<8x128xf32>
    %158 = arith.addf %155, %157 : vector<8x128xf32>
    %cst_68 = arith.constant 0.000000e+00 : f32
    %159 = vector.broadcast %cst_68 : f32 to vector<8x128xf32>
    %160 = arith.maximumf %158, %159 : vector<8x128xf32>
    %161 = arith.truncf %160 : vector<8x128xf32> to vector<8x128xbf16>
    %c0_69 = arith.constant 0 : index
    %c0_70 = arith.constant 0 : index
    %162 = vector.load %arg7[%c0_69, %c0_70] : memref<128x512xbf16, #tpu.memory_space<vmem>>, vector<128x512xbf16>
    %cst_71 = arith.constant dense<0.000000e+00> : vector<8x512xf32>
    %163 = tpu.matmul %161, %162, %cst_71 {dimension_numbers = #tpu.dot_dimension_numbers<[1], [0], [0], [1], [0, 0, 1, 1], [], []>} : vector<8x128xbf16>, vector<128x512xbf16>, vector<8x512xf32> -> vector<8x512xf32>
    %c0_72 = arith.constant 0 : index
    %c0_73 = arith.constant 0 : index
    %164 = vector.load %arg8[%c0_72, %c0_73] : memref<1x512xf32, #tpu.memory_space<vmem>>, vector<1x512xf32>
    %165 = vector.broadcast %164 : vector<1x512xf32> to vector<8x512xf32>
    %166 = arith.addf %163, %165 : vector<8x512xf32>
    %c0_74 = arith.constant 0 : index
    %c0_75 = arith.constant 0 : index
    %167 = vector.load %arg9[%c0_74, %c0_75] : memref<8x512xf32, #tpu.memory_space<vmem>>, vector<8x512xf32>
    tpu.vector_store %arg9[%c0_74, %c0_75], %166 {strides = array<i32>} : memref<8x512xf32, #tpu.memory_space<vmem>>, vector<8x512xf32>,
    return
  }
  func.func @transform_0(%arg0: i32, %arg1: memref<32xi32, #tpu.memory_space<smem>>) -> (i32, i32) {
    %c0_i32 = arith.constant 0 : i32
    %c0_i32_0 = arith.constant 0 : i32
    %c0_i32_1 = arith.constant 0 : i32
    return %c0_i32, %c0_i32_0 : i32, i32
  }
  func.func @transform_1(%arg0: i32, %arg1: memref<32xi32, #tpu.memory_space<smem>>) -> (i32, i32) {
    %c0_i32 = arith.constant 0 : i32
    %c0_i32_0 = arith.constant 0 : i32
    %c0_i32_1 = arith.constant 0 : i32
    return %c0_i32, %c0_i32_0 : i32, i32
  }
  func.func @transform_2(%arg0: i32, %arg1: memref<32xi32, #tpu.memory_space<smem>>) -> (i32, i32) {
    %c0_i32 = arith.constant 0 : i32
    %c0_i32_0 = arith.constant 0 : i32
    %c0_i32_1 = arith.constant 0 : i32
    return %c0_i32, %c0_i32_0 : i32, i32
  }
  func.func @transform_3(%arg0: i32, %arg1: memref<32xi32, #tpu.memory_space<smem>>) -> (i32, i32) {
    %c0_i32 = arith.constant 0 : i32
    %c0_i32_0 = arith.constant 0 : i32
    %c0_i32_1 = arith.constant 0 : i32
    return %c0_i32, %c0_i32_0 : i32, i32
  }
  func.func @transform_4(%arg0: i32, %arg1: memref<32xi32, #tpu.memory_space<smem>>) -> (i32, i32) {
    %c0_i32 = arith.constant 0 : i32
    %c0_i32_0 = arith.constant 0 : i32
    %c0_i32_1 = arith.constant 0 : i32
    return %c0_i32, %c0_i32_0 : i32, i32
  }
  func.func @transform_5(%arg0: i32, %arg1: memref<32xi32, #tpu.memory_space<smem>>) -> (i32, i32) {
    %c0_i32 = arith.constant 0 : i32
    %c0_i32_0 = arith.constant 0 : i32
    return %c0_i32, %arg0 : i32, i32
  }
  func.func @transform_6(%arg0: i32, %arg1: memref<32xi32, #tpu.memory_space<smem>>) -> (i32, i32) {
    %c0_i32 = arith.constant 0 : i32
    %c0_i32_0 = arith.constant 0 : i32
    return %c0_i32, %arg0 : i32, i32
  }
  func.func @transform_7(%arg0: i32, %arg1: memref<32xi32, #tpu.memory_space<smem>>) -> (i32, i32) {
    %c0_i32 = arith.constant 0 : i32
    %c0_i32_0 = arith.constant 0 : i32
    return %c0_i32, %arg0 : i32, i32
  }
}

</mosaic_0001>

<llo_original>
// kernel: cbow_forward.1
$region0: #{cbow_forward.1}
  #allocation0 [shape = 'u32[]', space=smem, size = 0x4, offset = 0x4, fixed_abs, tag = 'smem constant byte address 0x4 - core index']
  #allocation1 [shape = 'u32[144,128]{1,0:T(1,128)}', space=vmem, size = 0x12000, scoped, tag = 'internal scratch']
  #allocation2 [shape = 'f32[8,128]{1,0:T(8,128)}', space=vmem, size = 0x1000, scoped, tag = 'scratch operand']
  #allocation3 [shape = 's32[1]{0}', space=sflag, size = 0x4, scoped, tag = 'scoped memory for cbow_forward.1']
  #allocation4 [shape = 'u8[512]{0}', space=smem, size = 0x200, scoped, tag = 'prefetched SMEM operand 0']
  %s0 = inlined_call_operand.vmem [shape: s32[32], index: 0, kind: input, shape index: {}]
  %s1 = inlined_call_operand.hbm [shape: f32[512,128], index: 1, kind: input, shape index: {}]
  %s2 = inlined_call_operand.hbm [shape: bf16[128,256], index: 2, kind: input, shape index: {}]
  %s3 = inlined_call_operand.vmem [shape: f32[1,256], index: 3, kind: input, shape index: {}]
  %s4 = inlined_call_operand.hbm [shape: bf16[256,128], index: 4, kind: input, shape index: {}]
  %s5 = inlined_call_operand.vmem [shape: f32[1,128], index: 5, kind: input, shape index: {}]
  %s6 = inlined_call_operand.hbm [shape: bf16[128,512], index: 6, kind: input, shape index: {}]
  %s7 = inlined_call_operand.vmem [shape: f32[1,512], index: 7, kind: input, shape index: {}]
  %s8 = inlined_call_operand.hbm [shape: f32[8,512], index: 8, kind: output, shape index: {}]
  %s9 = sld [smem:[#allocation0]]
  $region54: #{cbow_forward.1} parent=0
    _
  %s11 = ssub.s32 1, %s9
  %s12 = scalar_select 0, %s11, %s9
  %s13 = sshll.u32 %s0, 4
  %s14 = int_to_ptr.vmem [resolvable:$true] %s13
  %16 = dma.vmem_to_smem %s14, 16, [#allocation4], [#allocation3]
  %17 = dma.done [#allocation3], 16
  %18 = sfence
  $region1: #{cbow_forward.1} parent=0
    #allocation5 [shape = 'u8[262144]{0}', space=vmem, size = 0x40000, scoped, tag = 'input window, operand 1, single buffered']
    #allocation6 [shape = 's32[1]{0}', space=sflag, size = 0x4, scoped, tag = 'scoped memory for cbow_forward.1']
    #allocation7 [shape = 's32[1]{0}', space=sflag, size = 0x4, scoped, tag = 'scoped memory for cbow_forward.1']
    #allocation8 [shape = 'u8[65536]{0}', space=vmem, size = 0x10000, scoped, tag = 'input window, operand 2, single buffered']
    #allocation9 [shape = 's32[1]{0}', space=sflag, size = 0x4, scoped, tag = 'scoped memory for cbow_forward.1']
    #allocation10 [shape = 'u8[65536]{0}', space=vmem, size = 0x10000, scoped, tag = 'input window, operand 4, single buffered']
    #allocation11 [shape = 'u8[131072]{0}', space=vmem, size = 0x20000, scoped, tag = 'input window, operand 6, single buffered']
    #allocation12 [shape = 's32[1]{0}', space=sflag, size = 0x4, scoped, tag = 'scoped memory for cbow_forward.1']
    #allocation13 [shape = 'u8[16384]{0}', space=vmem, size = 0x4000, scoped, tag = 'output window, operand 0, single buffered']
    %19 = vsyncpa [#allocation6], 0
    %20 = vsyncpa [#allocation9], 0
    %21 = vsyncpa [#allocation12], 0
    %22 = vsyncpa [#allocation7], 0
    // Predicated region
    $region2: #{cbow_forward.1} parent=1 // pred_check
      _
    $region3: #{cbow_forward.1} parent=1 // pred_check_branch
      %24 = sbr.rel (0) target = $region5
    $region4: #{cbow_forward.1} parent=1 // pred_region
      %s26 = ssub.s32 8192, 8192
      %27 = vsyncadd [#allocation6], %s26
      %s28 = sshll.u32 [#allocation5], 4
      %s29 = int_to_ptr.vmem [resolvable:$true] %s28
      %34 = dma.hbm_to_vmem [thread:$0]  %s1, 8192, %s29, [#allocation6], 128, 128, 8
    $region5: #{cbow_forward.1} parent=1 // pred_fallthru
      _
    // Predicated region
    $region6: #{cbow_forward.1} parent=1 // pred_check
      _
    $region7: #{cbow_forward.1} parent=1 // pred_check_branch
      %36 = sbr.rel (0) target = $region9
    $region8: #{cbow_forward.1} parent=1 // pred_region
      %s38 = ssub.s32 2048, 2048
      %39 = vsyncadd [#allocation9], %s38
      %s40 = sshll.u32 [#allocation8], 4
      %s41 = int_to_ptr.vmem [resolvable:$true] %s40
      %46 = dma.hbm_to_vmem [thread:$0]  %s2, 2048, %s41, [#allocation9], 128, 128, 8
    $region9: #{cbow_forward.1} parent=1 // pred_fallthru
      _
    // Predicated region
    $region10: #{cbow_forward.1} parent=1 // pred_check
      _
    $region11: #{cbow_forward.1} parent=1 // pred_check_branch
      %48 = sbr.rel (0) target = $region13
    $region12: #{cbow_forward.1} parent=1 // pred_region
      _
    $region13: #{cbow_forward.1} parent=1 // pred_fallthru
      _
    // Predicated region
    $region14: #{cbow_forward.1} parent=1 // pred_check
      _
    $region15: #{cbow_forward.1} parent=1 // pred_check_branch
      %50 = sbr.rel (0) target = $region17
    $region16: #{cbow_forward.1} parent=1 // pred_region
      %s52 = ssub.s32 2048, 2048
      %53 = vsyncadd [#allocation9], %s52
      %s54 = sshll.u32 [#allocation10], 4
      %s55 = int_to_ptr.vmem [resolvable:$true] %s54
      %60 = dma.hbm_to_vmem [thread:$0]  %s4, 2048, %s55, [#allocation9], 64, 64, 4
    $region17: #{cbow_forward.1} parent=1 // pred_fallthru
      _
    // Predicated region
    $region18: #{cbow_forward.1} parent=1 // pred_check
      _
    $region19: #{cbow_forward.1} parent=1 // pred_check_branch
      %62 = sbr.rel (0) target = $region21
    $region20: #{cbow_forward.1} parent=1 // pred_region
      _
    $region21: #{cbow_forward.1} parent=1 // pred_fallthru
      _
    // Predicated region
    $region22: #{cbow_forward.1} parent=1 // pred_check
      _
    $region23: #{cbow_forward.1} parent=1 // pred_check_branch
      %64 = sbr.rel (0) target = $region25
    $region24: #{cbow_forward.1} parent=1 // pred_region
      %s66 = ssub.s32 4096, 4096
      %67 = vsyncadd [#allocation12], %s66
      %s68 = sshll.u32 [#allocation11], 4
      %s69 = int_to_ptr.vmem [resolvable:$true] %s68
      %74 = dma.hbm_to_vmem [thread:$0]  %s6, 4096, %s69, [#allocation12], 256, 256, 16
    $region25: #{cbow_forward.1} parent=1 // pred_fallthru
      _
    // Predicated region
    $region26: #{cbow_forward.1} parent=1 // pred_check
      _
    $region27: #{cbow_forward.1} parent=1 // pred_check_branch
      %76 = sbr.rel (0) target = $region29
    $region28: #{cbow_forward.1} parent=1 // pred_region
      _
    $region29: #{cbow_forward.1} parent=1 // pred_fallthru
      _
    // Predicated region
    $region30: #{cbow_forward.1} parent=1 // pred_check
      _
    $region31: #{cbow_forward.1} parent=1 // pred_check_branch
      %78 = sbr.rel (0) target = $region33
    $region32: #{cbow_forward.1} parent=1 // pred_region
      %79 = dma.done [#allocation6], 8192
    $region33: #{cbow_forward.1} parent=1 // pred_fallthru
      _
    // Predicated region
    $region34: #{cbow_forward.1} parent=1 // pred_check
      _
    $region35: #{cbow_forward.1} parent=1 // pred_check_branch
      %81 = sbr.rel (0) target = $region37
    $region36: #{cbow_forward.1} parent=1 // pred_region
      %82 = dma.done [#allocation9], 2048
    $region37: #{cbow_forward.1} parent=1 // pred_fallthru
      _
    // Predicated region
    $region38: #{cbow_forward.1} parent=1 // pred_check
      _
    $region39: #{cbow_forward.1} parent=1 // pred_check_branch
      %84 = sbr.rel (0) target = $region41
    $region40: #{cbow_forward.1} parent=1 // pred_region
      %85 = dma.done [#allocation9], 2048
    $region41: #{cbow_forward.1} parent=1 // pred_fallthru
      _
    // Predicated region
    $region42: #{cbow_forward.1} parent=1 // pred_check
      _
    $region43: #{cbow_forward.1} parent=1 // pred_check_branch
      %87 = sbr.rel (0) target = $region45
    $region44: #{cbow_forward.1} parent=1 // pred_region
      %88 = dma.done [#allocation12], 4096
    $region45: #{cbow_forward.1} parent=1 // pred_fallthru
      _
    %s90 = sld [smem:[#allocation4]]
    %s91 = scalar_lea.vmem [#allocation5], %s90
    %v92 = vld [vmem:[%s91] sm:$0x1]
    %s93 = sld [smem:[#allocation4 + $0x1]]
    %s94 = scalar_lea.vmem [#allocation5], %s93
    %v95 = vld [vmem:[%s94] sm:$0x1]
    %v96 = vadd.f32 %v92, %v95
    %s97 = sld [smem:[#allocation4 + $0x2]]
    %s98 = scalar_lea.vmem [#allocation5], %s97
    %v99 = vld [vmem:[%s98] sm:$0x1]
    %v100 = vadd.f32 %v96, %v99
    %s101 = sld [smem:[#allocation4 + $0x3]]
    %s102 = scalar_lea.vmem [#allocation5], %s101
    %v103 = vld [vmem:[%s102] sm:$0x1]
    %v104 = vadd.f32 %v100, %v103
    %v105 = vmul.f32 %v104, 0.25
    %106 = vst [vmem:[#allocation2] sm:$0x1] %v105
    %s107 = sld [smem:[#allocation4 + $0x4]]
    %s108 = scalar_lea.vmem [#allocation5], %s107
    %v109 = vld [vmem:[%s108] sm:$0x1]
    %s110 = sld [smem:[#allocation4 + $0x5]]
    %s111 = scalar_lea.vmem [#allocation5], %s110
    %v112 = vld [vmem:[%s111] sm:$0x1]
    %v113 = vadd.f32 %v109, %v112
    %s114 = sld [smem:[#allocation4 + $0x6]]
    %s115 = scalar_lea.vmem [#allocation5], %s114
    %v116 = vld [vmem:[%s115] sm:$0x1]
    %v117 = vadd.f32 %v113, %v116
    %s118 = sld [smem:[#allocation4 + $0x7]]
    %s119 = scalar_lea.vmem [#allocation5], %s118
    %v120 = vld [vmem:[%s119] sm:$0x1]
    %v121 = vadd.f32 %v117, %v120
    %v122 = vmul.f32 %v121, 0.25
    %123 = vst [vmem:[#allocation2 + $0x1] sm:$0x1] %v122
    %s124 = sld [smem:[#allocation4 + $0x8]]
    %s125 = scalar_lea.vmem [#allocation5], %s124
    %v126 = vld [vmem:[%s125] sm:$0x1]
    %s127 = sld [smem:[#allocation4 + $0x9]]
    %s128 = scalar_lea.vmem [#allocation5], %s127
    %v129 = vld [vmem:[%s128] sm:$0x1]
    %v130 = vadd.f32 %v126, %v129
    %s131 = sld [smem:[#allocation4 + $0xa]]
    %s132 = scalar_lea.vmem [#allocation5], %s131
    %v133 = vld [vmem:[%s132] sm:$0x1]
    %v134 = vadd.f32 %v130, %v133
    %s135 = sld [smem:[#allocation4 + $0xb]]
    %s136 = scalar_lea.vmem [#allocation5], %s135
    %v137 = vld [vmem:[%s136] sm:$0x1]
    %v138 = vadd.f32 %v134, %v137
    %v139 = vmul.f32 %v138, 0.25
    %140 = vst [vmem:[#allocation2 + $0x2] sm:$0x1] %v139
    %s141 = sld [smem:[#allocation4 + $0xc]]
    %s142 = scalar_lea.vmem [#allocation5], %s141
    %v143 = vld [vmem:[%s142] sm:$0x1]
    %s144 = sld [smem:[#allocation4 + $0xd]]
    %s145 = scalar_lea.vmem [#allocation5], %s144
    %v146 = vld [vmem:[%s145] sm:$0x1]
    %v147 = vadd.f32 %v143, %v146
    %s148 = sld [smem:[#allocation4 + $0xe]]
    %s149 = scalar_lea.vmem [#allocation5], %s148
    %v150 = vld [vmem:[%s149] sm:$0x1]
    %v151 = vadd.f32 %v147, %v150
    %s152 = sld [smem:[#allocation4 + $0xf]]
    %s153 = scalar_lea.vmem [#allocation5], %s152
    %v154 = vld [vmem:[%s153] sm:$0x1]
    %v155 = vadd.f32 %v151, %v154
    %v156 = vmul.f32 %v155, 0.25
    %157 = vst [vmem:[#allocation2 + $0x3] sm:$0x1] %v156
    %s158 = sld [smem:[#allocation4 + $0x10]]
    %s159 = scalar_lea.vmem [#allocation5], %s158
    %v160 = vld [vmem:[%s159] sm:$0x1]
    %s161 = sld [smem:[#allocation4 + $0x11]]
    %s162 = scalar_lea.vmem [#allocation5], %s161
    %v163 = vld [vmem:[%s162] sm:$0x1]
    %v164 = vadd.f32 %v160, %v163
    %s165 = sld [smem:[#allocation4 + $0x12]]
    %s166 = scalar_lea.vmem [#allocation5], %s165
    %v167 = vld [vmem:[%s166] sm:$0x1]
    %v168 = vadd.f32 %v164, %v167
    %s169 = sld [smem:[#allocation4 + $0x13]]
    %s170 = scalar_lea.vmem [#allocation5], %s169
    %v171 = vld [vmem:[%s170] sm:$0x1]
    %v172 = vadd.f32 %v168, %v171
    %v173 = vmul.f32 %v172, 0.25
    %174 = vst [vmem:[#allocation2 + $0x4] sm:$0x1] %v173
    %s175 = sld [smem:[#allocation4 + $0x14]]
    %s176 = scalar_lea.vmem [#allocation5], %s175
    %v177 = vld [vmem:[%s176] sm:$0x1]
    %s178 = sld [smem:[#allocation4 + $0x15]]
    %s179 = scalar_lea.vmem [#allocation5], %s178
    %v180 = vld [vmem:[%s179] sm:$0x1]
    %v181 = vadd.f32 %v177, %v180
    %s182 = sld [smem:[#allocation4 + $0x16]]
    %s183 = scalar_lea.vmem [#allocation5], %s182
    %v184 = vld [vmem:[%s183] sm:$0x1]
    %v185 = vadd.f32 %v181, %v184
    %s186 = sld [smem:[#allocation4 + $0x17]]
    %s187 = scalar_lea.vmem [#allocation5], %s186
    %v188 = vld [vmem:[%s187] sm:$0x1]
    %v189 = vadd.f32 %v185, %v188
    %v190 = vmul.f32 %v189, 0.25
    %191 = vst [vmem:[#allocation2 + $0x5] sm:$0x1] %v190
    %s192 = sld [smem:[#allocation4 + $0x18]]
    %s193 = scalar_lea.vmem [#allocation5], %s192
    %v194 = vld [vmem:[%s193] sm:$0x1]
    %s195 = sld [smem:[#allocation4 + $0x19]]
    %s196 = scalar_lea.vmem [#allocation5], %s195
    %v197 = vld [vmem:[%s196] sm:$0x1]
    %v198 = vadd.f32 %v194, %v197
    %s199 = sld [smem:[#allocation4 + $0x1a]]
    %s200 = scalar_lea.vmem [#allocation5], %s199
    %v201 = vld [vmem:[%s200] sm:$0x1]
    %v202 = vadd.f32 %v198, %v201
    %s203 = sld [smem:[#allocation4 + $0x1b]]
    %s204 = scalar_lea.vmem [#allocation5], %s203
    %v205 = vld [vmem:[%s204] sm:$0x1]
    %v206 = vadd.f32 %v202, %v205
    %v207 = vmul.f32 %v206, 0.25
    %208 = vst [vmem:[#allocation2 + $0x6] sm:$0x1] %v207
    %s209 = sld [smem:[#allocation4 + $0x1c]]
    %s210 = scalar_lea.vmem [#allocation5], %s209
    %v211 = vld [vmem:[%s210] sm:$0x1]
    %s212 = sld [smem:[#allocation4 + $0x1d]]
    %s213 = scalar_lea.vmem [#allocation5], %s212
    %v214 = vld [vmem:[%s213] sm:$0x1]
    %v215 = vadd.f32 %v211, %v214
    %s216 = sld [smem:[#allocation4 + $0x1e]]
    %s217 = scalar_lea.vmem [#allocation5], %s216
    %v218 = vld [vmem:[%s217] sm:$0x1]
    %v219 = vadd.f32 %v215, %v218
    %s220 = sld [smem:[#allocation4 + $0x1f]]
    %s221 = scalar_lea.vmem [#allocation5], %s220
    %v222 = vld [vmem:[%s221] sm:$0x1]
    %v223 = vadd.f32 %v219, %v222
    %v224 = vmul.f32 %v223, 0.25
    %225 = vst [vmem:[#allocation2 + $0x7] sm:$0x1] %v224
    %v226 = vld [vmem:[#allocation2] sm:$0xff]
    %v227 = vpack.c.bf16 %v226, %v226
    %v228 = vld [vmem:[#allocation8] sm:$0xff]
    %v229 = vld [vmem:[#allocation8 + $0x8] sm:$0xff]
    %v230 = vld [vmem:[#allocation8 + $0x10] sm:$0xff]
    %v231 = vld [vmem:[#allocation8 + $0x18] sm:$0xff]
    %v232 = vld [vmem:[#allocation8 + $0x20] sm:$0xff]
    %v233 = vld [vmem:[#allocation8 + $0x28] sm:$0xff]
    %v234 = vld [vmem:[#allocation8 + $0x30] sm:$0xff]
    %v235 = vld [vmem:[#allocation8 + $0x38] sm:$0xff]
    %v236 = vld [vmem:[#allocation8 + $0x40] sm:$0xff]
    %v237 = vld [vmem:[#allocation8 + $0x48] sm:$0xff]
    %v238 = vld [vmem:[#allocation8 + $0x50] sm:$0xff]
    %v239 = vld [vmem:[#allocation8 + $0x58] sm:$0xff]
    %v240 = vld [vmem:[#allocation8 + $0x60] sm:$0xff]
    %v241 = vld [vmem:[#allocation8 + $0x68] sm:$0xff]
    %v242 = vld [vmem:[#allocation8 + $0x70] sm:$0xff]
    %v243 = vld [vmem:[#allocation8 + $0x78] sm:$0xff]
    %v244 = vld [vmem:[%s3] sm:$0x3]
    %v246 = vlaneseq
    %v247 = vshrl.u32 %v246, 7
    %v248 = vsub.s32 0, %v247
    %v249 = vrot.slane %v244, %v248
    %v250 = vlaneseq
    %v251 = vshrl.u32 %v250, 7
    %v252 = vsub.s32 1, %v251
    %v253 = vrot.slane %v244, %v252
    %v272 = vunpack.c.l.b16 %v228
    %v273 = vunpack.c.h.b16 %v228
    %v274 = vunpack.c.l.b16 %v229
    %v275 = vunpack.c.h.b16 %v229
    %v276 = vunpack.c.l.b16 %v230
    %v277 = vunpack.c.h.b16 %v230
    %v278 = vunpack.c.l.b16 %v231
    %v279 = vunpack.c.h.b16 %v231
    %v280 = vunpack.c.l.b16 %v232
    %v281 = vunpack.c.h.b16 %v232
    %v282 = vunpack.c.l.b16 %v233
    %v283 = vunpack.c.h.b16 %v233
    %v284 = vunpack.c.l.b16 %v234
    %v285 = vunpack.c.h.b16 %v234
    %v286 = vunpack.c.l.b16 %v235
    %v287 = vunpack.c.h.b16 %v235
    %v288 = vunpack.c.l.b16 %v236
    %v289 = vunpack.c.h.b16 %v236
    %v290 = vunpack.c.l.b16 %v237
    %v291 = vunpack.c.h.b16 %v237
    %v292 = vunpack.c.l.b16 %v238
    %v293 = vunpack.c.h.b16 %v238
    %v294 = vunpack.c.l.b16 %v239
    %v295 = vunpack.c.h.b16 %v239
    %v296 = vunpack.c.l.b16 %v240
    %v297 = vunpack.c.h.b16 %v240
    %v298 = vunpack.c.l.b16 %v241
    %v299 = vunpack.c.h.b16 %v241
    %v300 = vunpack.c.l.b16 %v242
    %v301 = vunpack.c.h.b16 %v242
    %v302 = vunpack.c.l.b16 %v243
    %v303 = vunpack.c.h.b16 %v243
    %v304 = vpack.c.b16 %v274, %v272
    %v305 = vpack.c.b16 %v275, %v273
    %v306 = vpack.c.b16 %v278, %v276
    %v307 = vpack.c.b16 %v279, %v277
    %v308 = vpack.c.b16 %v282, %v280
    %v309 = vpack.c.b16 %v283, %v281
    %v310 = vpack.c.b16 %v286, %v284
    %v311 = vpack.c.b16 %v287, %v285
    %v312 = vpack.c.b16 %v290, %v288
    %v313 = vpack.c.b16 %v291, %v289
    %v314 = vpack.c.b16 %v294, %v292
    %v315 = vpack.c.b16 %v295, %v293
    %v316 = vpack.c.b16 %v298, %v296
    %v317 = vpack.c.b16 %v299, %v297
    %v318 = vpack.c.b16 %v302, %v300
    %v319 = vpack.c.b16 %v303, %v301
    %336 = vmatprep.subr.bf16.mxu0 %v305
    %337 = vmatpush1.bf16.msra.mxu0 %v304
    %338 = vmatprep.subr.bf16.mxu0 %v307
    %339 = vmatpush1.bf16.msra.mxu0 %v306
    %340 = vmatprep.subr.bf16.mxu0 %v309
    %341 = vmatpush1.bf16.msra.mxu0 %v308
    %342 = vmatprep.subr.bf16.mxu0 %v311
    %343 = vmatpush1.bf16.msra.mxu0 %v310
    %344 = vmatprep.subr.bf16.mxu0 %v313
    %345 = vmatpush1.bf16.msra.mxu0 %v312
    %346 = vmatprep.subr.bf16.mxu0 %v315
    %347 = vmatpush1.bf16.msra.mxu0 %v314
    %348 = vmatprep.subr.bf16.mxu0 %v317
    %349 = vmatpush1.bf16.msra.mxu0 %v316
    %350 = vmatprep.subr.bf16.mxu0 %v319
    %351 = vmatpush1.bf16.msra.mxu0 %v318
    %352 = vmatprep.subr.bf16.mxu0 0
    %353 = vmatpush1.bf16.msra.mxu0 0
    %354 = vmatprep.subr.bf16.mxu0 0
    %355 = vmatpush1.bf16.msra.mxu0 0
    %356 = vmatprep.subr.bf16.mxu0 0
    %357 = vmatpush1.bf16.msra.mxu0 0
    %358 = vmatprep.subr.bf16.mxu0 0
    %359 = vmatpush1.bf16.msra.mxu0 0
    %360 = vmatprep.subr.bf16.mxu0 0
    %361 = vmatpush1.bf16.msra.mxu0 0
    %362 = vmatprep.subr.bf16.mxu0 0
    %363 = vmatpush1.bf16.msra.mxu0 0
    %364 = vmatprep.subr.bf16.mxu0 0
    %365 = vmatpush1.bf16.msra.mxu0 0
    %366 = vmatprep.subr.bf16.mxu0 0
    %367 = vmatpush1.bf16.msra.mxu0 0
    %368 = vmatprep.mubr.bf16.mxu0 0
    %369 = vmatmul.mubr.bf16.gmra.mrb[0].mxu0 %v227
    %v370 = vpop.f32.mrb[0].mxu0
    %v371 = vadd.f32 %v249, %v370
    %v372 = vpop.f32.mrb[0].mxu0
    %v373 = vadd.f32 %v253, %v372
    %v374 = vpop.f32.mrb[0].mxu0
    %v375 = vpop.f32.mrb[0].mxu0
    %376 = vdwg.mxu0
    %v377 = vmax.f32 %v371, 0.0
    %v378 = vmax.f32 %v373, 0.0
    %v379 = vpack.c.bf16 %v377, %v377
    %v380 = vpack.c.bf16 %v378, %v378
    %v381 = vld [vmem:[#allocation10] sm:$0xf]
    %v382 = vld [vmem:[#allocation10 + $0x4] sm:$0xf]
    %v383 = vld [vmem:[#allocation10 + $0x8] sm:$0xf]
    %v384 = vld [vmem:[#allocation10 + $0xc] sm:$0xf]
    %v385 = vld [vmem:[#allocation10 + $0x10] sm:$0xf]
    %v386 = vld [vmem:[#allocation10 + $0x14] sm:$0xf]
    %v387 = vld [vmem:[#allocation10 + $0x18] sm:$0xf]
    %v388 = vld [vmem:[#allocation10 + $0x1c] sm:$0xf]
    %v389 = vld [vmem:[#allocation10 + $0x20] sm:$0xf]
    %v390 = vld [vmem:[#allocation10 + $0x24] sm:$0xf]
    %v391 = vld [vmem:[#allocation10 + $0x28] sm:$0xf]
    %v392 = vld [vmem:[#allocation10 + $0x2c] sm:$0xf]
    %v393 = vld [vmem:[#allocation10 + $0x30] sm:$0xf]
    %v394 = vld [vmem:[#allocation10 + $0x34] sm:$0xf]
    %v395 = vld [vmem:[#allocation10 + $0x38] sm:$0xf]
    %v396 = vld [vmem:[#allocation10 + $0x3c] sm:$0xf]
    %v397 = vld [vmem:[#allocation10 + $0x40] sm:$0xf]
    %v398 = vld [vmem:[#allocation10 + $0x44] sm:$0xf]
    %v399 = vld [vmem:[#allocation10 + $0x48] sm:$0xf]
    %v400 = vld [vmem:[#allocation10 + $0x4c] sm:$0xf]
    %v401 = vld [vmem:[#allocation10 + $0x50] sm:$0xf]
    %v402 = vld [vmem:[#allocation10 + $0x54] sm:$0xf]
    %v403 = vld [vmem:[#allocation10 + $0x58] sm:$0xf]
    %v404 = vld [vmem:[#allocation10 + $0x5c] sm:$0xf]
    %v405 = vld [vmem:[#allocation10 + $0x60] sm:$0xf]
    %v406 = vld [vmem:[#allocation10 + $0x64] sm:$0xf]
    %v407 = vld [vmem:[#allocation10 + $0x68] sm:$0xf]
    %v408 = vld [vmem:[#allocation10 + $0x6c] sm:$0xf]
    %v409 = vld [vmem:[#allocation10 + $0x70] sm:$0xf]
    %v410 = vld [vmem:[#allocation10 + $0x74] sm:$0xf]
    %v411 = vld [vmem:[#allocation10 + $0x78] sm:$0xf]
    %v412 = vld [vmem:[#allocation10 + $0x7c] sm:$0xf]
    %v413 = vld [vmem:[%s5] sm:$0x1]
    %v415 = vlaneseq
    %v416 = vshrl.u32 %v415, 7
    %v417 = vsub.s32 0, %v416
    %v418 = vrot.slane %v413, %v417
    %v452 = vunpack.c.l.b16 %v381
    %v453 = vunpack.c.l.b16 %v382
    %v454 = vunpack.c.l.b16 %v383
    %v455 = vunpack.c.l.b16 %v384
    %v456 = vunpack.c.l.b16 %v385
    %v457 = vunpack.c.l.b16 %v386
    %v458 = vunpack.c.l.b16 %v387
    %v459 = vunpack.c.l.b16 %v388
    %v460 = vunpack.c.l.b16 %v389
    %v461 = vunpack.c.l.b16 %v390
    %v462 = vunpack.c.l.b16 %v391
    %v463 = vunpack.c.l.b16 %v392
    %v464 = vunpack.c.l.b16 %v393
    %v465 = vunpack.c.l.b16 %v394
    %v466 = vunpack.c.l.b16 %v395
    %v467 = vunpack.c.l.b16 %v396
    %v468 = vunpack.c.l.b16 %v397
    %v469 = vunpack.c.l.b16 %v398
    %v470 = vunpack.c.l.b16 %v399
    %v471 = vunpack.c.l.b16 %v400
    %v472 = vunpack.c.l.b16 %v401
    %v473 = vunpack.c.l.b16 %v402
    %v474 = vunpack.c.l.b16 %v403
    %v475 = vunpack.c.l.b16 %v404
    %v476 = vunpack.c.l.b16 %v405
    %v477 = vunpack.c.l.b16 %v406
    %v478 = vunpack.c.l.b16 %v407
    %v479 = vunpack.c.l.b16 %v408
    %v480 = vunpack.c.l.b16 %v409
    %v481 = vunpack.c.l.b16 %v410
    %v482 = vunpack.c.l.b16 %v411
    %v483 = vunpack.c.l.b16 %v412
    %v484 = vpack.c.b16 %v453, %v452
    %v485 = vpack.c.b16 %v455, %v454
    %v486 = vpack.c.b16 %v457, %v456
    %v487 = vpack.c.b16 %v459, %v458
    %v488 = vpack.c.b16 %v461, %v460
    %v489 = vpack.c.b16 %v463, %v462
    %v490 = vpack.c.b16 %v465, %v464
    %v491 = vpack.c.b16 %v467, %v466
    %v492 = vpack.c.b16 %v469, %v468
    %v493 = vpack.c.b16 %v471, %v470
    %v494 = vpack.c.b16 %v473, %v472
    %v495 = vpack.c.b16 %v475, %v474
    %v496 = vpack.c.b16 %v477, %v476
    %v497 = vpack.c.b16 %v479, %v478
    %v498 = vpack.c.b16 %v481, %v480
    %v499 = vpack.c.b16 %v483, %v482
    %516 = vmatprep.subr.bf16.mxu0 0
    %517 = vmatpush1.bf16.msra.mxu0 %v484
    %518 = vmatprep.subr.bf16.mxu0 0
    %519 = vmatpush1.bf16.msra.mxu0 %v485
    %520 = vmatprep.subr.bf16.mxu0 0
    %521 = vmatpush1.bf16.msra.mxu0 %v486
    %522 = vmatprep.subr.bf16.mxu0 0
    %523 = vmatpush1.bf16.msra.mxu0 %v487
    %524 = vmatprep.subr.bf16.mxu0 0
    %525 = vmatpush1.bf16.msra.mxu0 %v488
    %526 = vmatprep.subr.bf16.mxu0 0
    %527 = vmatpush1.bf16.msra.mxu0 %v489
    %528 = vmatprep.subr.bf16.mxu0 0
    %529 = vmatpush1.bf16.msra.mxu0 %v490
    %530 = vmatprep.subr.bf16.mxu0 0
    %531 = vmatpush1.bf16.msra.mxu0 %v491
    %532 = vmatprep.subr.bf16.mxu0 0
    %533 = vmatpush1.bf16.msra.mxu0 %v492
    %534 = vmatprep.subr.bf16.mxu0 0
    %535 = vmatpush1.bf16.msra.mxu0 %v493
    %536 = vmatprep.subr.bf16.mxu0 0
    %537 = vmatpush1.bf16.msra.mxu0 %v494
    %538 = vmatprep.subr.bf16.mxu0 0
    %539 = vmatpush1.bf16.msra.mxu0 %v495
    %540 = vmatprep.subr.bf16.mxu0 0
    %541 = vmatpush1.bf16.msra.mxu0 %v496
    %542 = vmatprep.subr.bf16.mxu0 0
    %543 = vmatpush1.bf16.msra.mxu0 %v497
    %544 = vmatprep.subr.bf16.mxu0 0
    %545 = vmatpush1.bf16.msra.mxu0 %v498
    %546 = vmatprep.subr.bf16.mxu0 0
    %547 = vmatpush1.bf16.msra.mxu0 %v499
    %548 = vmatprep.mubr.bf16.mxu0 %v380
    %549 = vmatmul.mubr.bf16.gmra.mrb[0].mxu0 %v379
    %v550 = vpop.f32.mrb[0].mxu0
    %v551 = vadd.f32 %v418, %v550
    %v552 = vpop.f32.mrb[0].mxu0
    %v553 = vpop.f32.mrb[0].mxu0
    %v554 = vpop.f32.mrb[0].mxu0
    %555 = vdwg.mxu0
    %v556 = vmax.f32 %v551, 0.0
    %v557 = vpack.c.bf16 %v556, %v556
    %v558 = vld [vmem:[#allocation11] sm:$0xff]
    %v559 = vld [vmem:[#allocation11 + $0x8] sm:$0xff]
    %v560 = vld [vmem:[#allocation11 + $0x10] sm:$0xff]
    %v561 = vld [vmem:[#allocation11 + $0x18] sm:$0xff]
    %v562 = vld [vmem:[#allocation11 + $0x20] sm:$0xff]
    %v563 = vld [vmem:[#allocation11 + $0x28] sm:$0xff]
    %v564 = vld [vmem:[#allocation11 + $0x30] sm:$0xff]
    %v565 = vld [vmem:[#allocation11 + $0x38] sm:$0xff]
    %v566 = vld [vmem:[#allocation11 + $0x40] sm:$0xff]
    %v567 = vld [vmem:[#allocation11 + $0x48] sm:$0xff]
    %v568 = vld [vmem:[#allocation11 + $0x50] sm:$0xff]
    %v569 = vld [vmem:[#allocation11 + $0x58] sm:$0xff]
    %v570 = vld [vmem:[#allocation11 + $0x60] sm:$0xff]
    %v571 = vld [vmem:[#allocation11 + $0x68] sm:$0xff]
    %v572 = vld [vmem:[#allocation11 + $0x70] sm:$0xff]
    %v573 = vld [vmem:[#allocation11 + $0x78] sm:$0xff]
    %v574 = vld [vmem:[#allocation11 + $0x80] sm:$0xff]
    %v575 = vld [vmem:[#allocation11 + $0x88] sm:$0xff]
    %v576 = vld [vmem:[#allocation11 + $0x90] sm:$0xff]
    %v577 = vld [vmem:[#allocation11 + $0x98] sm:$0xff]
    %v578 = vld [vmem:[#allocation11 + $0xa0] sm:$0xff]
    %v579 = vld [vmem:[#allocation11 + $0xa8] sm:$0xff]
    %v580 = vld [vmem:[#allocation11 + $0xb0] sm:$0xff]
    %v581 = vld [vmem:[#allocation11 + $0xb8] sm:$0xff]
    %v582 = vld [vmem:[#allocation11 + $0xc0] sm:$0xff]
    %v583 = vld [vmem:[#allocation11 + $0xc8] sm:$0xff]
    %v584 = vld [vmem:[#allocation11 + $0xd0] sm:$0xff]
    %v585 = vld [vmem:[#allocation11 + $0xd8] sm:$0xff]
    %v586 = vld [vmem:[#allocation11 + $0xe0] sm:$0xff]
    %v587 = vld [vmem:[#allocation11 + $0xe8] sm:$0xff]
    %v588 = vld [vmem:[#allocation11 + $0xf0] sm:$0xff]
    %v589 = vld [vmem:[#allocation11 + $0xf8] sm:$0xff]
    %v590 = vld [vmem:[%s7] sm:$0xf]
    %v592 = vlaneseq
    %v593 = vshrl.u32 %v592, 7
    %v594 = vsub.s32 0, %v593
    %v595 = vrot.slane %v590, %v594
    %v596 = vlaneseq
    %v597 = vshrl.u32 %v596, 7
    %v598 = vsub.s32 1, %v597
    %v599 = vrot.slane %v590, %v598
    %v600 = vlaneseq
    %v601 = vshrl.u32 %v600, 7
    %v602 = vsub.s32 2, %v601
    %v603 = vrot.slane %v590, %v602
    %v604 = vlaneseq
    %v605 = vshrl.u32 %v604, 7
    %v606 = vsub.s32 3, %v605
    %v607 = vrot.slane %v590, %v606
    %v644 = vunpack.c.l.b16 %v558
    %v645 = vunpack.c.h.b16 %v558
    %v646 = vunpack.c.l.b16 %v559
    %v647 = vunpack.c.h.b16 %v559
    %v648 = vunpack.c.l.b16 %v560
    %v649 = vunpack.c.h.b16 %v560
    %v650 = vunpack.c.l.b16 %v561
    %v651 = vunpack.c.h.b16 %v561
    %v652 = vunpack.c.l.b16 %v562
    %v653 = vunpack.c.h.b16 %v562
    %v654 = vunpack.c.l.b16 %v563
    %v655 = vunpack.c.h.b16 %v563
    %v656 = vunpack.c.l.b16 %v564
    %v657 = vunpack.c.h.b16 %v564
    %v658 = vunpack.c.l.b16 %v565
    %v659 = vunpack.c.h.b16 %v565
    %v660 = vunpack.c.l.b16 %v566
    %v661 = vunpack.c.h.b16 %v566
    %v662 = vunpack.c.l.b16 %v567
    %v663 = vunpack.c.h.b16 %v567
    %v664 = vunpack.c.l.b16 %v568
    %v665 = vunpack.c.h.b16 %v568
    %v666 = vunpack.c.l.b16 %v569
    %v667 = vunpack.c.h.b16 %v569
    %v668 = vunpack.c.l.b16 %v570
    %v669 = vunpack.c.h.b16 %v570
    %v670 = vunpack.c.l.b16 %v571
    %v671 = vunpack.c.h.b16 %v571
    %v672 = vunpack.c.l.b16 %v572
    %v673 = vunpack.c.h.b16 %v572
    %v674 = vunpack.c.l.b16 %v573
    %v675 = vunpack.c.h.b16 %v573
    %v676 = vunpack.c.l.b16 %v574
    %v677 = vunpack.c.h.b16 %v574
    %v678 = vunpack.c.l.b16 %v575
    %v679 = vunpack.c.h.b16 %v575
    %v680 = vunpack.c.l.b16 %v576
    %v681 = vunpack.c.h.b16 %v576
    %v682 = vunpack.c.l.b16 %v577
    %v683 = vunpack.c.h.b16 %v577
    %v684 = vunpack.c.l.b16 %v578
    %v685 = vunpack.c.h.b16 %v578
    %v686 = vunpack.c.l.b16 %v579
    %v687 = vunpack.c.h.b16 %v579
    %v688 = vunpack.c.l.b16 %v580
    %v689 = vunpack.c.h.b16 %v580
    %v690 = vunpack.c.l.b16 %v581
    %v691 = vunpack.c.h.b16 %v581
    %v692 = vunpack.c.l.b16 %v582
    %v693 = vunpack.c.h.b16 %v582
    %v694 = vunpack.c.l.b16 %v583
    %v695 = vunpack.c.h.b16 %v583
    %v696 = vunpack.c.l.b16 %v584
    %v697 = vunpack.c.h.b16 %v584
    %v698 = vunpack.c.l.b16 %v585
    %v699 = vunpack.c.h.b16 %v585
    %v700 = vunpack.c.l.b16 %v586
    %v701 = vunpack.c.h.b16 %v586
    %v702 = vunpack.c.l.b16 %v587
    %v703 = vunpack.c.h.b16 %v587
    %v704 = vunpack.c.l.b16 %v588
    %v705 = vunpack.c.h.b16 %v588
    %v706 = vunpack.c.l.b16 %v589
    %v707 = vunpack.c.h.b16 %v589
    %v708 = vpack.c.b16 %v648, %v644
    %v709 = vpack.c.b16 %v649, %v645
    %v710 = vpack.c.b16 %v650, %v646
    %v711 = vpack.c.b16 %v651, %v647
    %v712 = vpack.c.b16 %v656, %v652
    %v713 = vpack.c.b16 %v657, %v653
    %v714 = vpack.c.b16 %v658, %v654
    %v715 = vpack.c.b16 %v659, %v655
    %v716 = vpack.c.b16 %v664, %v660
    %v717 = vpack.c.b16 %v665, %v661
    %v718 = vpack.c.b16 %v666, %v662
    %v719 = vpack.c.b16 %v667, %v663
    %v720 = vpack.c.b16 %v672, %v668
    %v721 = vpack.c.b16 %v673, %v669
    %v722 = vpack.c.b16 %v674, %v670
    %v723 = vpack.c.b16 %v675, %v671
    %v724 = vpack.c.b16 %v680, %v676
    %v725 = vpack.c.b16 %v681, %v677
    %v726 = vpack.c.b16 %v682, %v678
    %v727 = vpack.c.b16 %v683, %v679
    %v728 = vpack.c.b16 %v688, %v684
    %v729 = vpack.c.b16 %v689, %v685
    %v730 = vpack.c.b16 %v690, %v686
    %v731 = vpack.c.b16 %v691, %v687
    %v732 = vpack.c.b16 %v696, %v692
    %v733 = vpack.c.b16 %v697, %v693
    %v734 = vpack.c.b16 %v698, %v694
    %v735 = vpack.c.b16 %v699, %v695
    %v736 = vpack.c.b16 %v704, %v700
    %v737 = vpack.c.b16 %v705, %v701
    %v738 = vpack.c.b16 %v706, %v702
    %v739 = vpack.c.b16 %v707, %v703
    %772 = vmatprep.subr.bf16.mxu0 %v709
    %773 = vmatpush1.bf16.msra.mxu0 %v708
    %774 = vmatprep.subr.bf16.mxu0 %v713
    %775 = vmatpush1.bf16.msra.mxu0 %v712
    %776 = vmatprep.subr.bf16.mxu0 %v717
    %777 = vmatpush1.bf16.msra.mxu0 %v716
    %778 = vmatprep.subr.bf16.mxu0 %v721
    %779 = vmatpush1.bf16.msra.mxu0 %v720
    %780 = vmatprep.subr.bf16.mxu0 %v725
    %781 = vmatpush1.bf16.msra.mxu0 %v724
    %782 = vmatprep.subr.bf16.mxu0 %v729
    %783 = vmatpush1.bf16.msra.mxu0 %v728
    %784 = vmatprep.subr.bf16.mxu0 %v733
    %785 = vmatpush1.bf16.msra.mxu0 %v732
    %786 = vmatprep.subr.bf16.mxu0 %v737
    %787 = vmatpush1.bf16.msra.mxu0 %v736
    %788 = vmatprep.subr.bf16.mxu0 0
    %789 = vmatpush1.bf16.msra.mxu0 0
    %790 = vmatprep.subr.bf16.mxu0 0
    %791 = vmatpush1.bf16.msra.mxu0 0
    %792 = vmatprep.subr.bf16.mxu0 0
    %793 = vmatpush1.bf16.msra.mxu0 0
    %794 = vmatprep.subr.bf16.mxu0 0
    %795 = vmatpush1.bf16.msra.mxu0 0
    %796 = vmatprep.subr.bf16.mxu0 0
    %797 = vmatpush1.bf16.msra.mxu0 0
    %798 = vmatprep.subr.bf16.mxu0 0
    %799 = vmatpush1.bf16.msra.mxu0 0
    %800 = vmatprep.subr.bf16.mxu0 0
    %801 = vmatpush1.bf16.msra.mxu0 0
    %802 = vmatprep.subr.bf16.mxu0 0
    %803 = vmatpush1.bf16.msra.mxu0 0
    %804 = vmatprep.mubr.bf16.mxu0 0
    %805 = vmatmul.mubr.bf16.gmra.mrb[0].mxu0 %v557
    %v806 = vpop.f32.mrb[0].mxu0
    %v807 = vadd.f32 %v595, %v806
    %v808 = vpop.f32.mrb[0].mxu0
    %v809 = vadd.f32 %v599, %v808
    %v810 = vpop.f32.mrb[0].mxu0
    %v811 = vpop.f32.mrb[0].mxu0
    %812 = vdwg.mxu0
    %813 = vmatprep.subr.bf16.mxu0 %v711
    %814 = vmatpush1.bf16.msra.mxu0 %v710
    %815 = vmatprep.subr.bf16.mxu0 %v715
    %816 = vmatpush1.bf16.msra.mxu0 %v714
    %817 = vmatprep.subr.bf16.mxu0 %v719
    %818 = vmatpush1.bf16.msra.mxu0 %v718
    %819 = vmatprep.subr.bf16.mxu0 %v723
    %820 = vmatpush1.bf16.msra.mxu0 %v722
    %821 = vmatprep.subr.bf16.mxu0 %v727
    %822 = vmatpush1.bf16.msra.mxu0 %v726
    %823 = vmatprep.subr.bf16.mxu0 %v731
    %824 = vmatpush1.bf16.msra.mxu0 %v730
    %825 = vmatprep.subr.bf16.mxu0 %v735
    %826 = vmatpush1.bf16.msra.mxu0 %v734
    %827 = vmatprep.subr.bf16.mxu0 %v739
    %828 = vmatpush1.bf16.msra.mxu0 %v738
    %829 = vmatprep.subr.bf16.mxu0 0
    %830 = vmatpush1.bf16.msra.mxu0 0
    %831 = vmatprep.subr.bf16.mxu0 0
    %832 = vmatpush1.bf16.msra.mxu0 0
    %833 = vmatprep.subr.bf16.mxu0 0
    %834 = vmatpush1.bf16.msra.mxu0 0
    %835 = vmatprep.subr.bf16.mxu0 0
    %836 = vmatpush1.bf16.msra.mxu0 0
    %837 = vmatprep.subr.bf16.mxu0 0
    %838 = vmatpush1.bf16.msra.mxu0 0
    %839 = vmatprep.subr.bf16.mxu0 0
    %840 = vmatpush1.bf16.msra.mxu0 0
    %841 = vmatprep.subr.bf16.mxu0 0
    %842 = vmatpush1.bf16.msra.mxu0 0
    %843 = vmatprep.subr.bf16.mxu0 0
    %844 = vmatpush1.bf16.msra.mxu0 0
    %845 = vmatprep.mubr.bf16.mxu0 0
    %846 = vmatmul.mubr.bf16.gmra.mrb[0].mxu0 %v557
    %v847 = vpop.f32.mrb[0].mxu0
    %v848 = vadd.f32 %v603, %v847
    %v849 = vpop.f32.mrb[0].mxu0
    %v850 = vadd.f32 %v607, %v849
    %v851 = vpop.f32.mrb[0].mxu0
    %v852 = vpop.f32.mrb[0].mxu0
    %853 = vdwg.mxu0
    %854 = vst [vmem:[#allocation13] sm:$0xff] %v807
    %855 = vst [vmem:[#allocation13 + $0x8] sm:$0xff] %v809
    %856 = vst [vmem:[#allocation13 + $0x10] sm:$0xff] %v848
    %857 = vst [vmem:[#allocation13 + $0x18] sm:$0xff] %v850
    // Predicated region
    $region46: #{cbow_forward.1} parent=1 // pred_check
      _
    $region47: #{cbow_forward.1} parent=1 // pred_check_branch
      %859 = sbr.rel (0) target = $region49
    $region48: #{cbow_forward.1} parent=1 // pred_region
      %s861 = ssub.s32 512, 512
      %862 = vsyncadd [#allocation7], %s861
      %s864 = sshll.u32 [#allocation13], 4
      %s865 = int_to_ptr.vmem [resolvable:$true] %s864
      %867 = dma.vmem_to_hbm [thread:$0]  %s865, 512, %s8, [#allocation7]
    $region49: #{cbow_forward.1} parent=1 // pred_fallthru
      _
    // Predicated region
    $region50: #{cbow_forward.1} parent=1 // pred_check
      _
    $region51: #{cbow_forward.1} parent=1 // pred_check_branch
      %869 = sbr.rel (0) target = $region53
    $region52: #{cbow_forward.1} parent=1 // pred_region
      %870 = dma.done [#allocation7], 512
    $region53: #{cbow_forward.1} parent=1 // pred_fallthru
      _
    %871 = vsyncpa [#allocation6], 1
    %872 = vsyncpa [#allocation9], 1
    %873 = vsyncpa [#allocation12], 1
    %874 = vsyncpa [#allocation7], 1

</llo_original>
